<compile_context>
chip_gen: v5e
topology: v5e:2x2
jax: 0.10.0
libtpu: 0.0.40
codegen_flags: <defaults>
</compile_context>

<pallas_src>
import jax
import jax.numpy as jnp
from jax.experimental import pallas as pl
from jax.experimental.pallas import tpu as pltpu

_TARGET_BLOCK_BYTES = 8 << 20   # ~8 MiB input tile (mem-bound op)
_VMEM_LIMIT_BYTES = 40 << 20    # 2 bufs x (in + out) x 8 MiB = 32 MiB + headroom
_MAX_LANE = 2048                # widest last dim considered


def _h_sigmoid_kernel(x_ref, o_ref):
    x = x_ref[...]
    # relu6(x + 3) / 6 == clip(x + 3, 0, 6) * (1/6).  VPU work is free filler
    # under the HBM DMA bound, so no wrapper-side pre-scaling.
    o_ref[...] = (jnp.clip(x + 3.0, 0.0, 6.0) * (1.0 / 6.0)).astype(o_ref.dtype)


def _h_sigmoid_math(x):
    # Plain-jnp path for tiny tails / tiny tensors.
    return (jnp.clip(x + 3.0, 0.0, 6.0) * (1.0 / 6.0)).astype(x.dtype)


def _tensorcores_per_chip() -> int:
    """1 for single-TC chips (v5e / v6e); 2 for dual-TC chips (v4 megacore, v7x)."""
    try:
        kind = jax.devices()[0].device_kind.lower()
    except Exception:
        return 1
    if "lite" in kind or "v5e" in kind or "v6" in kind:
        return 1
    return 2


def _choose_lane_dim(total: int, sub: int) -> int:
    """Widest L (multiple of 128, <= 2048) dividing `total`.

    Prefer an L whose row count is a multiple of the dtype sublane count so the
    slab fills whole vregs; fall back to the widest divisor; 0 if none exists.
    """
    best = 0
    for cand in range(_MAX_LANE, 0, -128):
        if total % cand:
            continue
        if (total // cand) % sub == 0:
            return cand
        if best == 0:
            best = cand
    return best


def _choose_block_rows(rows: int, lane: int, itemsize: int, sub: int, ncores: int) -> int:
    """Sublane-aligned block row count targeting ~8 MiB tiles.

    On dual-TC chips force at least `ncores` (balanced) grid steps so both
    cores get fed; on single-TC chips the block is purely byte-driven.
    """
    if rows <= sub:
        return rows                                    # single full-extent block
    by_bytes = max(sub, (_TARGET_BLOCK_BYTES // (lane * itemsize)) // sub * sub)
    steps = pl.cdiv(rows, by_bytes)
    if ncores > 1:
        steps = max(steps, ncores)
        steps = ((steps + ncores - 1) // ncores) * ncores
    block_rows = ((pl.cdiv(rows, steps) + sub - 1) // sub) * sub
    if block_rows >= rows:
        return rows                                     # full extent is always legal
    return block_rows


def _h_sigmoid_2d(x2d: jax.Array, block_rows: int) -> jax.Array:
    rows, lane = x2d.shape
    grid = (pl.cdiv(rows, block_rows),)                 # ragged tail block is masked
    return pl.pallas_call(
        _h_sigmoid_kernel,
        out_shape=jax.ShapeDtypeStruct((rows, lane), x2d.dtype),
        grid=grid,
        in_specs=[pl.BlockSpec((block_rows, lane), lambda i: (i, 0))],
        out_specs=pl.BlockSpec((block_rows, lane), lambda i: (i, 0)),
        compiler_params=pltpu.CompilerParams(
            # "parallel" lets the grid shard across both TCs on dual-core chips
            # (verify in a v7x trace; single-TC chips are unaffected).
            dimension_semantics=("parallel",),
            vmem_limit_bytes=_VMEM_LIMIT_BYTES,
        ),
    )(x2d)


@jax.jit
def h_sigmoid(x: jax.Array) -> jax.Array:
    """Elementwise hard-sigmoid matching PyTorch F.relu6(x + 3) / 6. Any shape."""
    # NOTE: intended for float dtypes (as in MobileNetV3); integer inputs would
    # promote through the float clip and truncate on the cast back.
    orig_shape = x.shape
    total = int(x.size)
    if total == 0:
        return x
    itemsize = jnp.dtype(x.dtype).itemsize
    sub = 8 * max(1, 4 // itemsize)          # f32 -> 8, bf16 -> 16, int8 -> 32
    ncores = _tensorcores_per_chip()

    lane = _choose_lane_dim(total, sub)
    if lane:
        # Common case: element count divisible by 128 -> zero-copy 2D slab.
        rows = total // lane
        block_rows = _choose_block_rows(rows, lane, itemsize, sub, ncores)
        return _h_sigmoid_2d(x.reshape(rows, lane), block_rows).reshape(orig_shape)

    # Ragged element count (not a multiple of 128): Pallas on the 128-aligned
    # prefix, tiny (<128 elem) tail with plain jnp.  No pad / no output slice.
    aligned = (total // 128) * 128
    x_flat = x.reshape(-1)
    if aligned == 0:
        return _h_sigmoid_math(x_flat).reshape(orig_shape)
    lane = _choose_lane_dim(aligned, sub)
    rows = aligned // lane
    block_rows = _choose_block_rows(rows, lane, itemsize, sub, ncores)
    main = _h_sigmoid_2d(x_flat[:aligned].reshape(rows, lane), block_rows).reshape(-1)
    tail = _h_sigmoid_math(x_flat[aligned:])
    return jnp.concatenate([main, tail]).reshape(orig_shape)


if __name__ == "__main__":
    key = jax.random.PRNGKey(0)

    # NCHW input like the PyTorch module would see inside MobileNetV3.
    x = jax.random.normal(key, (2, 4, 16, 16), dtype=jnp.float32) * 4.0
    y = h_sigmoid(x)
    jax.block_until_ready(y)
    y_ref = jnp.clip(x + 3.0, 0.0, 6.0) / 6.0
    assert y.shape == x.shape and y.dtype == x.dtype
    assert jnp.max(jnp.abs(y - y_ref)) < 1e-6

    # Awkward element count exercises the ragged (prefix + jnp tail) path.
    x2 = jax.random.normal(jax.random.PRNGKey(1), (3, 24, 17, 19), dtype=jnp.float32) * 4.0
    y2 = h_sigmoid(x2)
    jax.block_until_ready(y2)
    y2_ref = jnp.clip(x2 + 3.0, 0.0, 6.0) / 6.0
    assert y2.shape == x2.shape and y2.dtype == x2.dtype
    assert jnp.max(jnp.abs(y2 - y2_ref)) < 1e-6

    print("KERNEL_OK")
</pallas_src>

<mosaic_0001>
module attributes {stable_mosaic.version = 11 : i64} {
  func.func @_h_sigmoid_kernel(%arg0: i32, %arg1: memref<8x256xf32, #tpu.memory_space<vmem>>, %arg2: memref<8x256xf32, #tpu.memory_space<vmem>>) attributes {dimension_semantics = [#tpu.dimension_semantics<parallel>], iteration_bounds = array<i64: 1>, scalar_prefetch = 0 : i64, scratch_operands = 0 : i64, tpu.core_type = #tpu.core_type<tc>, window_params = [{transform_indices = @transform_0, window_bounds = array<i64: 8, 256>}, {transform_indices = @transform_1, window_bounds = array<i64: 8, 256>}]} {
    %c0 = arith.constant 0 : index
    %c0_0 = arith.constant 0 : index
    %0 = vector.load %arg1[%c0, %c0_0] : memref<8x256xf32, #tpu.memory_space<vmem>>, vector<8x256xf32>
    %cst = arith.constant 3.000000e+00 : f32
    %1 = vector.broadcast %cst : f32 to vector<8x256xf32>
    %2 = arith.addf %0, %1 : vector<8x256xf32>
    %cst_1 = arith.constant 0.000000e+00 : f32
    %cst_2 = arith.constant 6.000000e+00 : f32
    %3 = vector.broadcast %cst_1 : f32 to vector<8x256xf32>
    %4 = arith.maximumf %3, %2 : vector<8x256xf32>
    %5 = vector.broadcast %cst_2 : f32 to vector<8x256xf32>
    %6 = arith.minimumf %5, %4 : vector<8x256xf32>
    %cst_3 = arith.constant 0.166666672 : f32
    %7 = vector.broadcast %cst_3 : f32 to vector<8x256xf32>
    %8 = arith.mulf %6, %7 : vector<8x256xf32>
    %c0_4 = arith.constant 0 : index
    %c0_5 = arith.constant 0 : index
    %9 = vector.load %arg2[%c0_4, %c0_5] : memref<8x256xf32, #tpu.memory_space<vmem>>, vector<8x256xf32>
    tpu.vector_store %arg2[%c0_4, %c0_5], %8 {strides = array<i32>} : memref<8x256xf32, #tpu.memory_space<vmem>>, vector<8x256xf32>,
    return
  }
  func.func @transform_0(%arg0: i32) -> (i32, i32) {
    %c0_i32 = arith.constant 0 : i32
    %c0_i32_0 = arith.constant 0 : i32
    return %arg0, %c0_i32 : i32, i32
  }
  func.func @transform_1(%arg0: i32) -> (i32, i32) {
    %c0_i32 = arith.constant 0 : i32
    %c0_i32_0 = arith.constant 0 : i32
    return %arg0, %c0_i32 : i32, i32
  }
}

</mosaic_0001>

<llo_original>
// kernel: h_sigmoid.1
$region0: #{h_sigmoid.1}
  #allocation0 [shape = 'u32[]', space=smem, size = 0x4, offset = 0x4, fixed_abs, tag = 'smem constant byte address 0x4 - core index']
  #allocation1 [shape = 'u32[72,128]{1,0:T(1,128)}', space=vmem, size = 0x9000, scoped, tag = 'internal scratch']
  %s0 = inlined_call_operand.vmem [shape: f32[8,256], index: 0, kind: input, shape index: {}]
  %s1 = inlined_call_operand.vmem [shape: f32[8,256], index: 1, kind: output, shape index: {}]
  %s2 = sld [smem:[#allocation0]]
  $region14: #{h_sigmoid.1} parent=0
    _
  %s4 = ssub.s32 1, %s2
  %s5 = scalar_select 0, %s4, %s2
  // Predicated region
  $region2: #{h_sigmoid.1} parent=0 // pred_check
    _
  $region3: #{h_sigmoid.1} parent=0 // pred_check_branch
    %7 = sbr.rel (0) target = $region5
  $region4: #{h_sigmoid.1} parent=0 // pred_region
    _
  $region5: #{h_sigmoid.1} parent=0 // pred_fallthru
    _
  %v8 = vld [vmem:[%s0] sm:$0xff]
  %v9 = vld [vmem:[%s0 + $0x8] sm:$0xff]
  %v10 = vadd.f32 %v8, 3.0
  %v11 = vadd.f32 %v9, 3.0
  %v12 = vmax.f32 %v10, 0.0
  %v13 = vmax.f32 %v11, 0.0
  %v14 = vmin.f32 %v12, 6.0
  %v15 = vmin.f32 %v13, 6.0
  %v16 = vmul.f32 %v14, 0.16666667
  %v17 = vmul.f32 %v15, 0.16666667
  %18 = vst [vmem:[%s1] sm:$0xff] %v16
  %19 = vst [vmem:[%s1 + $0x8] sm:$0xff] %v17
  // Predicated region
  $region6: #{h_sigmoid.1} parent=0 // pred_check
    _
  $region7: #{h_sigmoid.1} parent=0 // pred_check_branch
    %21 = sbr.rel (0) target = $region9
  $region8: #{h_sigmoid.1} parent=0 // pred_region
    _
  $region9: #{h_sigmoid.1} parent=0 // pred_fallthru
    _
  // Predicated region
  $region10: #{h_sigmoid.1} parent=0 // pred_check
    _
  $region11: #{h_sigmoid.1} parent=0 // pred_check_branch
    %23 = sbr.rel (0) target = $region13
  $region12: #{h_sigmoid.1} parent=0 // pred_region
    _
  $region13: #{h_sigmoid.1} parent=0 // pred_fallthru
    _

</llo_original>
